<compile_context>
chip_gen: v5e
topology: v5e:2x2
jax: 0.10.0
libtpu: 0.0.40
codegen_flags: <defaults>
</compile_context>

<pallas_src>
import functools

import jax
import jax.numpy as jnp
from jax.experimental import pallas as pl
from jax.experimental.pallas import tpu as pltpu

LANES = 128
MAX_BLOCK_ROWS = 2048  # 2048 x 128 f32 = 1 MiB per input stream per block


def _cdiv(a, b):
    return (a + b - 1) // b


def _round_up(a, b):
    return _cdiv(a, b) * b


def _focal_loss_kernel(x_ref, t_ref, o_ref, *, gamma, block_rows,
                       blocks_per_core, full_rows, rem_lanes, need_mask):
    c = pl.program_id(0)   # core-split ("parallel") axis
    i = pl.program_id(1)   # reduction ("arbitrary") axis

    @pl.when(i == 0)
    def _init():
        o_ref[...] = jnp.zeros_like(o_ref)

    x = x_ref[...].astype(jnp.float32)
    t = t_ref[...].astype(jnp.float32)

    # BCE-with-logits:  x - x*t + softplus(-x)
    #   softplus(-x) = max(-x, 0) + log1p(exp(-|x|))     (1 exp + 1 log1p)
    # This is algebraically identical to the PyTorch form
    #   max_val + log(exp(-max_val) + exp(-x - max_val)).
    bce = x - x * t + jnp.maximum(-x, 0.0) + jnp.log1p(jnp.exp(-jnp.abs(x)))

    # Focal modulation: exp(gamma * logsigmoid(z)),  z = -x * (2t - 1).
    z = x - 2.0 * x * t
    g_int = int(gamma)
    if float(gamma) == float(g_int) and 0 <= g_int <= 8:
        # sigmoid(z)**gamma via repeated multiply (default gamma=2 path).
        if g_int == 0:
            w = jnp.ones_like(z)
        else:
            s = 1.0 / (1.0 + jnp.exp(-z))
            w = s
            for _ in range(g_int - 1):
                w = w * s
    else:
        # General (non-integer) gamma: stable logsigmoid.
        logsig = -(jnp.maximum(-z, 0.0) + jnp.log1p(jnp.exp(-jnp.abs(z))))
        w = jnp.exp(gamma * logsig)

    loss = w * bce

    if need_mask:
        # Zero out padded elements (only compiled in when padding exists).
        row = jax.lax.broadcasted_iota(jnp.int32, loss.shape, 0)
        lane = jax.lax.broadcasted_iota(jnp.int32, loss.shape, 1)
        g_row = (c * blocks_per_core + i) * block_rows + row
        valid = g_row < full_rows
        if rem_lanes:
            valid = valid | ((g_row == full_rows) & (lane < rem_lanes))
        loss = jnp.where(valid, loss, 0.0)

    # Fold the (block_rows, 128) tile into the resident (1, 8, 128) output
    # accumulator with elementwise vreg adds (VPU only, no per-step XLU).
    partial = jnp.sum(loss.reshape(-1, 8, LANES), axis=0)
    o_ref[...] += partial[None]


def focal_loss(inp, target, gamma=2.0, *, max_block_rows=MAX_BLOCK_ROWS,
               num_core_splits=2):
    """Mean sigmoid focal loss over all elements of `inp`/`target`."""
    if inp.shape != target.shape:
        raise ValueError(
            "Target size ({}) must be the same as input size ({})".format(
                target.shape, inp.shape))

    total = int(inp.size)

    rows = _cdiv(total, LANES)
    block_rows = min(max_block_rows, _round_up(rows, 8))
    nblocks = _cdiv(rows, block_rows)
    ncores = num_core_splits if nblocks >= num_core_splits else 1
    blocks_per_core = _cdiv(nblocks, ncores)
    padded_rows = ncores * blocks_per_core * block_rows
    padded_total = padded_rows * LANES
    pad = padded_total - total

    # Keep native dtype; only pad when the flat size is ragged w.r.t. the grid.
    x_flat = inp.reshape(-1)
    t_flat = target.reshape(-1)
    if pad:
        x_flat = jnp.pad(x_flat, (0, pad))
        t_flat = jnp.pad(t_flat, (0, pad))
    x2 = x_flat.reshape(padded_rows, LANES)
    t2 = t_flat.reshape(padded_rows, LANES)

    kernel = functools.partial(
        _focal_loss_kernel,
        gamma=float(gamma),
        block_rows=block_rows,
        blocks_per_core=blocks_per_core,
        full_rows=total // LANES,
        rem_lanes=total % LANES,
        need_mask=(pad > 0),
    )

    idx_map = lambda c, i: (c * blocks_per_core + i, 0)

    out = pl.pallas_call(
        kernel,
        out_shape=jax.ShapeDtypeStruct((ncores, 8, LANES), jnp.float32),
        grid_spec=pltpu.PrefetchScalarGridSpec(
            num_scalar_prefetch=0,
            grid=(ncores, blocks_per_core),
            in_specs=[
                pl.BlockSpec((block_rows, LANES), idx_map),
                pl.BlockSpec((block_rows, LANES), idx_map),
            ],
            out_specs=pl.BlockSpec((1, 8, LANES), lambda c, i: (c, 0, 0)),
        ),
        compiler_params=pltpu.CompilerParams(
            dimension_semantics=("parallel", "arbitrary")),
    )(x2, t2)

    # Tiny epilogue: sum the per-core (8,128) partials and apply 1/total.
    return jnp.sum(out) * jnp.float32(1.0 / total)


def _focal_loss_ref(inp, target, gamma=2.0):
    # Direct transcription of the PyTorch module.
    x = inp.astype(jnp.float32)
    t = target.astype(jnp.float32)
    max_val = jnp.maximum(-x, 0.0)
    loss = x - x * t + max_val + jnp.log(jnp.exp(-max_val) + jnp.exp(-x - max_val))
    invprobs = jax.nn.log_sigmoid(-x * (t * 2.0 - 1.0))
    loss = jnp.exp(invprobs * gamma) * loss
    return jnp.mean(loss)


if __name__ == "__main__":
    key = jax.random.PRNGKey(0)
    k1, k2, k3, k4 = jax.random.split(key, 4)

    # Detection-style logits / multi-label targets, NCHW: (2, 4, 16, 16).
    x = jax.random.normal(k1, (2, 4, 16, 16), dtype=jnp.float32) * 2.0
    tgt = (jax.random.uniform(k2, (2, 4, 16, 16)) > 0.5).astype(jnp.float32)

    out = focal_loss(x, tgt, gamma=2.0)
    out = jax.block_until_ready(out)
    ref = _focal_loss_ref(x, tgt, gamma=2.0)
    assert jnp.allclose(out, ref, rtol=2e-5, atol=1e-6), (out, ref)

    # Larger ragged input: exercises the in-kernel padding mask, multi-block
    # grid and the 2-way core split path.
    xb = jax.random.normal(k3, (2, 8, 181, 181), dtype=jnp.float32) * 2.0
    tb = (jax.random.uniform(k4, (2, 8, 181, 181)) > 0.5).astype(jnp.float32)
    out_b = jax.block_until_ready(focal_loss(xb, tb, gamma=2.0))
    ref_b = _focal_loss_ref(xb, tb, gamma=2.0)
    assert jnp.allclose(out_b, ref_b, rtol=1e-4, atol=1e-6), (out_b, ref_b)

    print("KERNEL_OK")
</pallas_src>

<mosaic_0001>
module attributes {stable_mosaic.version = 11 : i64} {
  func.func @_focal_loss_kernel(%arg0: i32, %arg1: i32, %arg2: memref<16x128xf32, #tpu.memory_space<vmem>>, %arg3: memref<16x128xf32, #tpu.memory_space<vmem>>, %arg4: memref<1x8x128xf32, #tpu.memory_space<vmem>>) attributes {dimension_semantics = [#tpu.dimension_semantics<parallel>, #tpu.dimension_semantics<arbitrary>], iteration_bounds = array<i64: 1, 1>, scalar_prefetch = 0 : i64, scratch_operands = 0 : i64, tpu.core_type = #tpu.core_type<tc>, window_params = [{transform_indices = @transform_0, window_bounds = array<i64: 16, 128>}, {transform_indices = @transform_1, window_bounds = array<i64: 16, 128>}, {transform_indices = @transform_2, window_bounds = array<i64: 1, 8, 128>}]} {
    %c0_i32 = arith.constant 0 : i32
    %0 = arith.cmpi eq, %arg1, %c0_i32 : i32
    %1 = arith.extui %0 : i1 to i32
    %c0_i32_0 = arith.constant 0 : i32
    %2 = arith.cmpi ne, %1, %c0_i32_0 : i32
    scf.if %2 {
      %cst_17 = arith.constant 0.000000e+00 : f32
      %37 = vector.broadcast %cst_17 : f32 to vector<1x8x128xf32>
      %c0_18 = arith.constant 0 : index
      %c0_19 = arith.constant 0 : index
      %c0_20 = arith.constant 0 : index
      %38 = vector.load %arg4[%c0_18, %c0_19, %c0_20] : memref<1x8x128xf32, #tpu.memory_space<vmem>>, vector<1x8x128xf32>
      tpu.vector_store %arg4[%c0_18, %c0_19, %c0_20], %37 {strides = array<i32>} : memref<1x8x128xf32, #tpu.memory_space<vmem>>, vector<1x8x128xf32>,
    } else {
    }
    %c0 = arith.constant 0 : index
    %c0_1 = arith.constant 0 : index
    %3 = vector.load %arg2[%c0, %c0_1] : memref<16x128xf32, #tpu.memory_space<vmem>>, vector<16x128xf32>
    %c0_2 = arith.constant 0 : index
    %c0_3 = arith.constant 0 : index
    %4 = vector.load %arg3[%c0_2, %c0_3] : memref<16x128xf32, #tpu.memory_space<vmem>>, vector<16x128xf32>
    %5 = arith.mulf %3, %4 : vector<16x128xf32>
    %6 = arith.subf %3, %5 : vector<16x128xf32>
    %cst = arith.constant 0.000000e+00 : f32
    %7 = vector.broadcast %cst : f32 to vector<16x128xf32>
    %8 = arith.subf %7, %3 : vector<16x128xf32>
    %cst_4 = arith.constant 0.000000e+00 : f32
    %9 = vector.broadcast %cst_4 : f32 to vector<16x128xf32>
    %10 = arith.maximumf %8, %9 : vector<16x128xf32>
    %11 = arith.addf %6, %10 : vector<16x128xf32>
    %12 = math.absf %3 : vector<16x128xf32>
    %cst_5 = arith.constant 0.000000e+00 : f32
    %13 = vector.broadcast %cst_5 : f32 to vector<16x128xf32>
    %14 = arith.subf %13, %12 : vector<16x128xf32>
    %15 = math.exp %14 : vector<16x128xf32>
    %16 = math.log1p %15 : vector<16x128xf32>
    %17 = arith.addf %11, %16 : vector<16x128xf32>
    %cst_6 = arith.constant 2.000000e+00 : f32
    %18 = vector.broadcast %cst_6 : f32 to vector<16x128xf32>
    %19 = arith.mulf %18, %3 : vector<16x128xf32>
    %20 = arith.mulf %19, %4 : vector<16x128xf32>
    %21 = arith.subf %3, %20 : vector<16x128xf32>
    %cst_7 = arith.constant 0.000000e+00 : f32
    %22 = vector.broadcast %cst_7 : f32 to vector<16x128xf32>
    %23 = arith.subf %22, %21 : vector<16x128xf32>
    %24 = math.exp %23 : vector<16x128xf32>
    %cst_8 = arith.constant 1.000000e+00 : f32
    %25 = vector.broadcast %cst_8 : f32 to vector<16x128xf32>
    %26 = arith.addf %25, %24 : vector<16x128xf32>
    %cst_9 = arith.constant 1.000000e+00 : f32
    %27 = vector.broadcast %cst_9 : f32 to vector<16x128xf32>
    %28 = arith.divf %27, %26 : vector<16x128xf32>
    %29 = arith.mulf %28, %28 : vector<16x128xf32>
    %30 = arith.mulf %29, %17 : vector<16x128xf32>
    %31 = vector.shape_cast %30 : vector<16x128xf32> to vector<2x8x128xf32>
    %cst_10 = arith.constant dense<0.000000e+00> : vector<8x128xf32>
    %32 = vector.multi_reduction <add>, %31, %cst_10 [0] : vector<2x8x128xf32> to vector<8x128xf32>
    %c0_11 = arith.constant 0 : index
    %c0_12 = arith.constant 0 : index
    %c0_13 = arith.constant 0 : index
    %33 = vector.load %arg4[%c0_11, %c0_12, %c0_13] : memref<1x8x128xf32, #tpu.memory_space<vmem>>, vector<1x8x128xf32>
    %34 = vector.shape_cast %32 : vector<8x128xf32> to vector<1x8x128xf32>
    %35 = arith.addf %33, %34 : vector<1x8x128xf32>
    %c0_14 = arith.constant 0 : index
    %c0_15 = arith.constant 0 : index
    %c0_16 = arith.constant 0 : index
    %36 = vector.load %arg4[%c0_14, %c0_15, %c0_16] : memref<1x8x128xf32, #tpu.memory_space<vmem>>, vector<1x8x128xf32>
    tpu.vector_store %arg4[%c0_14, %c0_15, %c0_16], %35 {strides = array<i32>} : memref<1x8x128xf32, #tpu.memory_space<vmem>>, vector<1x8x128xf32>,
    return
  }
  func.func @transform_0(%arg0: i32, %arg1: i32) -> (i32, i32) {
    %c1_i32 = arith.constant 1 : i32
    %0 = arith.muli %arg0, %c1_i32 : i32
    %1 = arith.addi %0, %arg1 : i32
    %c0_i32 = arith.constant 0 : i32
    %c0_i32_0 = arith.constant 0 : i32
    return %1, %c0_i32 : i32, i32
  }
  func.func @transform_1(%arg0: i32, %arg1: i32) -> (i32, i32) {
    %c1_i32 = arith.constant 1 : i32
    %0 = arith.muli %arg0, %c1_i32 : i32
    %1 = arith.addi %0, %arg1 : i32
    %c0_i32 = arith.constant 0 : i32
    %c0_i32_0 = arith.constant 0 : i32
    return %1, %c0_i32 : i32, i32
  }
  func.func @transform_2(%arg0: i32, %arg1: i32) -> (i32, i32, i32) {
    %c0_i32 = arith.constant 0 : i32
    %c0_i32_0 = arith.constant 0 : i32
    %c0_i32_1 = arith.constant 0 : i32
    return %arg0, %c0_i32, %c0_i32_0 : i32, i32, i32
  }
}

</mosaic_0001>

<llo_original>
// kernel: tpu_custom_call.1
$region0: #{tpu_custom_call.1}
  #allocation0 [shape = 'u32[]', space=smem, size = 0x4, offset = 0x4, fixed_abs, tag = 'smem constant byte address 0x4 - core index']
  #allocation1 [shape = 'u32[72,128]{1,0:T(1,128)}', space=vmem, size = 0x9000, scoped, tag = 'internal scratch']
  %s0 = inlined_call_operand.hbm [shape: f32[16,128], index: 0, kind: input, shape index: {}]
  %s1 = inlined_call_operand.hbm [shape: f32[16,128], index: 1, kind: input, shape index: {}]
  %s2 = inlined_call_operand.hbm [shape: f32[1,8,128], index: 2, kind: output, shape index: {}]
  %s3 = sld [smem:[#allocation0]]
  $region30: #{tpu_custom_call.1} parent=0
    _
  %s5 = ssub.s32 1, %s3
  %s6 = scalar_select 0, %s5, %s3
  $region1: #{tpu_custom_call.1} parent=0
    #allocation2 [shape = 'u8[8192]{0}', space=vmem, size = 0x2000, scoped, tag = 'input window, operand 0, single buffered']
    #allocation3 [shape = 's32[1]{0}', space=sflag, size = 0x4, scoped, tag = 'scoped memory for tpu_custom_call.1']
    #allocation4 [shape = 's32[1]{0}', space=sflag, size = 0x4, scoped, tag = 'scoped memory for tpu_custom_call.1']
    #allocation5 [shape = 'u8[8192]{0}', space=vmem, size = 0x2000, scoped, tag = 'input window, operand 1, single buffered']
    #allocation6 [shape = 's32[1]{0}', space=sflag, size = 0x4, scoped, tag = 'scoped memory for tpu_custom_call.1']
    #allocation7 [shape = 'u8[4096]{0}', space=vmem, size = 0x1000, scoped, tag = 'output window, operand 0, single buffered']
    %7 = vsyncpa [#allocation3], 0
    %8 = vsyncpa [#allocation6], 0
    %9 = vsyncpa [#allocation4], 0
    // Predicated region
    $region2: #{tpu_custom_call.1} parent=1 // pred_check
      _
    $region3: #{tpu_custom_call.1} parent=1 // pred_check_branch
      %11 = sbr.rel (0) target = $region5
    $region4: #{tpu_custom_call.1} parent=1 // pred_region
      %s12 = sadd.s32 0, 0
      %s13 = smul.u32 2, %s12
      %15 = vsyncadd [#allocation3], 0
      %s16 = smul.addr %s13, 8
      %s17 = scalar_lea.hbm %s0, %s16
      %s18 = sshll.u32 %s17, 4
      %s19 = int_to_ptr.hbm [resolvable:$true] %s18
      %s20 = sshll.u32 [#allocation2], 4
      %s21 = int_to_ptr.vmem [resolvable:$true] %s20
      %26 = dma.hbm_to_vmem [thread:$0]  %s19, 256, %s21, [#allocation3], 128, 128, 8
    $region5: #{tpu_custom_call.1} parent=1 // pred_fallthru
      _
    // Predicated region
    $region6: #{tpu_custom_call.1} parent=1 // pred_check
      _
    $region7: #{tpu_custom_call.1} parent=1 // pred_check_branch
      %28 = sbr.rel (0) target = $region9
    $region8: #{tpu_custom_call.1} parent=1 // pred_region
      %s29 = sadd.s32 0, 0
      %s30 = smul.u32 2, %s29
      %32 = vsyncadd [#allocation6], 0
      %s33 = smul.addr %s30, 8
      %s34 = scalar_lea.hbm %s1, %s33
      %s35 = sshll.u32 %s34, 4
      %s36 = int_to_ptr.hbm [resolvable:$true] %s35
      %s37 = sshll.u32 [#allocation5], 4
      %s38 = int_to_ptr.vmem [resolvable:$true] %s37
      %43 = dma.hbm_to_vmem [thread:$0]  %s36, 256, %s38, [#allocation6], 128, 128, 8
    $region9: #{tpu_custom_call.1} parent=1 // pred_fallthru
      _
    // Predicated region
    $region10: #{tpu_custom_call.1} parent=1 // pred_check
      _
    $region11: #{tpu_custom_call.1} parent=1 // pred_check_branch
      %45 = sbr.rel (0) target = $region13
    $region12: #{tpu_custom_call.1} parent=1 // pred_region
      %47 = dma.done [#allocation3], 256
    $region13: #{tpu_custom_call.1} parent=1 // pred_fallthru
      _
    // Predicated region
    $region14: #{tpu_custom_call.1} parent=1 // pred_check
      _
    $region15: #{tpu_custom_call.1} parent=1 // pred_check_branch
      %49 = sbr.rel (0) target = $region17
    $region16: #{tpu_custom_call.1} parent=1 // pred_region
      %51 = dma.done [#allocation6], 256
    $region17: #{tpu_custom_call.1} parent=1 // pred_fallthru
      _
    %s52 = sadd.s32 0, 0
    %s53 = smul.u32 2, %s52
    %s54 = sadd.s32 0, 0
    %s55 = smul.u32 2, %s54
    %p56 = scmp.eq.s32.totalorder 0, 0
    // Predicated region
    $region18: #{tpu_custom_call.1} parent=1 // pred_check
      %p57 = pneg %p56
    $region19: #{tpu_custom_call.1} parent=1 // pred_check_branch
      %59 = sbr.rel (%p57) target = $region21
    $region20: #{tpu_custom_call.1} parent=1 // pred_region
      %60 = vst [vmem:[#allocation7] sm:$0xff] 0.0
    $region21: #{tpu_custom_call.1} parent=1 // pred_fallthru
      _
    %v61 = vld [vmem:[#allocation2] sm:$0xff]
    %v62 = vld [vmem:[#allocation2 + $0x8] sm:$0xff]
    %v63 = vld [vmem:[#allocation5] sm:$0xff]
    %v64 = vld [vmem:[#allocation5 + $0x8] sm:$0xff]
    %v65 = vmul.f32 %v61, %v63
    %v66 = vmul.f32 %v62, %v64
    %v67 = vsub.f32 %v61, %v65
    %v68 = vsub.f32 %v62, %v66
    %v69 = vsub.f32 0.0, %v61
    %v70 = vsub.f32 0.0, %v62
    %v71 = vmax.f32 %v69, 0.0
    %v72 = vmax.f32 %v70, 0.0
    %v73 = vadd.f32 %v67, %v71
    %v74 = vadd.f32 %v68, %v72
    %v75 = vand.u32 2147483647, %v61
    %v76 = vand.u32 2147483647, %v62
    %v77 = vsub.f32 0.0, %v75
    %v78 = vsub.f32 0.0, %v76
    %v79 = vmul.f32 %v77, 1.442695
    %v80 = vpow.pop %v79
    %v81 = vmul.f32 %v78, 1.442695
    %v82 = vpow.pop %v81
    %v83 = vadd.f32 %v80, 1.0
    %v84 = vlog2.pop %v83
    %v85 = vmul.f32 %v84, 0.6931472
    %v86 = vmul.f32 -0.5, %v80
    %v87 = vadd.f32 %v86, 1.0
    %v88 = vmul.f32 %v87, %v80
    %v89 = vand.u32 2147483647, %v80
    %vm90 = vcmp.lt.f32.partialorder %v89, 0.0004427343
    %v91 = vsel %vm90, %v88, %v85
    %v92 = vadd.f32 %v82, 1.0
    %v93 = vlog2.pop %v92
    %v94 = vmul.f32 %v93, 0.6931472
    %v95 = vmul.f32 -0.5, %v82
    %v96 = vadd.f32 %v95, 1.0
    %v97 = vmul.f32 %v96, %v82
    %v98 = vand.u32 2147483647, %v82
    %vm99 = vcmp.lt.f32.partialorder %v98, 0.0004427343
    %v100 = vsel %vm99, %v97, %v94
    %v101 = vadd.f32 %v73, %v91
    %v102 = vadd.f32 %v74, %v100
    %v103 = vmul.f32 %v61, 2.0
    %v104 = vmul.f32 %v62, 2.0
    %v105 = vmul.f32 %v103, %v63
    %v106 = vmul.f32 %v104, %v64
    %v107 = vsub.f32 %v61, %v105
    %v108 = vsub.f32 %v62, %v106
    %v109 = vsub.f32 0.0, %v107
    %v110 = vsub.f32 0.0, %v108
    %v111 = vmul.f32 %v109, 1.442695
    %v112 = vpow.pop %v111
    %v113 = vmul.f32 %v110, 1.442695
    %v114 = vpow.pop %v113
    %v115 = vadd.f32 %v112, 1.0
    %v116 = vadd.f32 %v114, 1.0
    %v117 = vrcp.pop %v115
    %v118 = vmul.f32 %v115, %v117
    %v119 = vsub.f32 1.0, %v118
    %v120 = vmul.f32 %v117, %v119
    %v121 = vadd.f32 %v117, %v120
    %vm122 = vweird.f32 %v115
    %vm123 = vweird.f32 %v117
    %vm124 = vmor %vm122, %vm123
    %v125 = vsel %vm124, %v117, %v121
    %v126 = vand.u32 2147483647, %v115
    %vm127 = vcmp.eq.f32.partialorder %v126, 8.507059e+37
    %v128 = vand.u32 %v115, 2147483648
    %v129 = vor.u32 1.1754944e-38, %v128
    %v130 = vsel %vm127, %v129, %v125
    %v131 = vmul.f32 1.0, %v130
    %v132 = vrcp.pop %v116
    %v133 = vmul.f32 %v116, %v132
    %v134 = vsub.f32 1.0, %v133
    %v135 = vmul.f32 %v132, %v134
    %v136 = vadd.f32 %v132, %v135
    %vm137 = vweird.f32 %v116
    %vm138 = vweird.f32 %v132
    %vm139 = vmor %vm137, %vm138
    %v140 = vsel %vm139, %v132, %v136
    %v141 = vand.u32 2147483647, %v116
    %vm142 = vcmp.eq.f32.partialorder %v141, 8.507059e+37
    %v143 = vand.u32 %v116, 2147483648
    %v144 = vor.u32 1.1754944e-38, %v143
    %v145 = vsel %vm142, %v144, %v140
    %v146 = vmul.f32 1.0, %v145
    %v147 = vmul.f32 %v131, %v131
    %v148 = vmul.f32 %v146, %v146
    %v149 = vmul.f32 %v147, %v101
    %v150 = vmul.f32 %v148, %v102
    %v151 = vadd.f32 %v149, %v150
    %v152 = vld [vmem:[#allocation7] sm:$0xff]
    %v153 = vadd.f32 %v152, %v151
    %154 = vst [vmem:[#allocation7] sm:$0xff] %v153
    // Predicated region
    $region22: #{tpu_custom_call.1} parent=1 // pred_check
      _
    $region23: #{tpu_custom_call.1} parent=1 // pred_check_branch
      %156 = sbr.rel (0) target = $region25
    $region24: #{tpu_custom_call.1} parent=1 // pred_region
      %158 = vsyncadd [#allocation4], 0
      %s160 = sshll.u32 [#allocation7], 4
      %s161 = int_to_ptr.vmem [resolvable:$true] %s160
      %s162 = sshll.u32 %s2, 4
      %s163 = int_to_ptr.hbm [resolvable:$true] %s162
      %165 = dma.vmem_to_hbm [thread:$0]  %s161, 128, %s163, [#allocation4]
    $region25: #{tpu_custom_call.1} parent=1 // pred_fallthru
      _
    // Predicated region
    $region26: #{tpu_custom_call.1} parent=1 // pred_check
      _
    $region27: #{tpu_custom_call.1} parent=1 // pred_check_branch
      %167 = sbr.rel (0) target = $region29
    $region28: #{tpu_custom_call.1} parent=1 // pred_region
      %169 = dma.done [#allocation4], 128
    $region29: #{tpu_custom_call.1} parent=1 // pred_fallthru
      _
    %170 = vsyncpa [#allocation3], 1
    %171 = vsyncpa [#allocation6], 1
    %172 = vsyncpa [#allocation4], 1

</llo_original>
